<compile_context>
chip_gen: v6e
topology: v6e:2x2x1
jax: 0.10.0
libtpu: 0.0.40
codegen_flags: <defaults>
</compile_context>

<pallas_src>
import math

import jax
import jax.numpy as jnp
from jax.experimental import pallas as pl
from jax.experimental.pallas import tpu as pltpu

_MEAN = 0.1307
_STD = 0.3081


def _round_up(n, m):
    return ((n + m - 1) // m) * m


def _mlp_kernel(x_ref, w1_ref, b1_ref, w2_ref, b2_ref, w3_ref, b3_ref, o_ref):
    # Normalization already folded into (w1, b1).  bf16 MXU matmuls with f32
    # accumulation; everything else in f32.
    x = x_ref[...].astype(jnp.bfloat16)
    h1 = jnp.dot(x, w1_ref[...], preferred_element_type=jnp.float32)
    h1 = jnp.maximum(h1 + b1_ref[...], 0.0)

    h2 = jnp.dot(h1.astype(jnp.bfloat16), w2_ref[...],
                 preferred_element_type=jnp.float32)
    h2 = jnp.maximum(h2 + b2_ref[...], 0.0)

    logits = jnp.dot(h2, w3_ref[...], preferred_element_type=jnp.float32) + b3_ref[...]
    o_ref[...] = jax.nn.sigmoid(logits).astype(o_ref.dtype)


def prepare_params(params, *, hidden_pad=128, matmul_dtype=jnp.bfloat16):
    """Fold the input normalization into layer 1, zero-pad hidden_dim to a
    lane-dense width, and cast the layer-1/2 weights to bf16 for the MXU.

    The fold and the zero-padding are exactness-preserving:
      ((x - m)/s) @ W + b == x @ (W/s) + (b - (m/s) * W.sum(0))
    and zero-padded hidden channels stay identically zero through ReLU.
    The bf16 weight cast introduces ~1e-3-level relative error vs. f32.
    """
    w1, b1 = params["w1"], params["b1"]
    w2, b2 = params["w2"], params["b2"]
    w3, b3 = params["w3"], params["b3"]

    w1f = w1 / _STD
    b1f = b1 - (_MEAN / _STD) * jnp.sum(w1, axis=0, keepdims=True)

    h = w1.shape[1]
    hp = max(hidden_pad, _round_up(h, 128))
    if hp != h:
        pad = hp - h
        w1f = jnp.pad(w1f, ((0, 0), (0, pad)))
        b1f = jnp.pad(b1f, ((0, 0), (0, pad)))
        w2 = jnp.pad(w2, ((0, pad), (0, pad)))
        b2 = jnp.pad(b2, ((0, 0), (0, pad)))
        w3 = jnp.pad(w3, ((0, pad), (0, 0)))

    return {
        "w1": w1f.astype(matmul_dtype),
        "b1": b1f.astype(jnp.float32),
        "w2": w2.astype(matmul_dtype),
        "b2": b2.astype(jnp.float32),
        "w3": w3.astype(jnp.float32),
        "b3": b3.astype(jnp.float32),
    }


def membership_inference_attacker(x, prepared_params, *, block_b=1024):
    """x: [B, C, H, W] float32 (bf16 also accepted).  prepared_params: output
    of prepare_params.  Returns [B, 1] float32 sigmoid probabilities, matching
    the PyTorch module's forward.
    """
    B = x.shape[0]
    x_flat = x.reshape(B, -1)  # nn.Flatten() equivalent (row-major, NCHW)
    D = x_flat.shape[1]

    w1, b1 = prepared_params["w1"], prepared_params["b1"]
    w2, b2 = prepared_params["w2"], prepared_params["b2"]
    w3, b3 = prepared_params["w3"], prepared_params["b3"]
    Hp = w1.shape[1]

    # Pad rows only to a sublane multiple (<= 7 extra rows); no full-tile pad.
    B8 = _round_up(B, 8)
    if B8 != B:
        x_flat = jnp.pad(x_flat, ((0, B8 - B), (0, 0)))

    # Batch tile: multiple of 8 sublanes.  TB=1024 -> 4 MiB f32 x tile per
    # buffer (8 MiB double-buffered) + ~0.3 MiB bf16 weights: fits the default
    # scoped VMEM on v5e/v6e/v7x.  Partial last block handled by Pallas.
    TB = min(_round_up(block_b, 8), B8)
    grid = (pl.cdiv(B8, TB),)

    x_bytes = x_flat.dtype.itemsize
    weight_bytes = (2 * (D * Hp + Hp * Hp)          # bf16 w1, w2
                    + 4 * (Hp + Hp + Hp + 1))        # f32 b1, b2, w3, b3
    cost = pl.CostEstimate(
        flops=2 * B8 * (D * Hp + Hp * Hp + Hp),
        transcendentals=B8,
        bytes_accessed=B8 * D * x_bytes + weight_bytes + B8 * 4,
    )

    out = pl.pallas_call(
        _mlp_kernel,
        out_shape=jax.ShapeDtypeStruct((B8, 1), jnp.float32),
        grid=grid,
        in_specs=[
            pl.BlockSpec((TB, D), lambda i: (i, 0)),        # x tile (streamed)
            pl.BlockSpec((D, Hp), lambda i: (0, 0)),        # w1 (VMEM-resident)
            pl.BlockSpec((1, Hp), lambda i: (0, 0)),        # b1
            pl.BlockSpec((Hp, Hp), lambda i: (0, 0)),       # w2
            pl.BlockSpec((1, Hp), lambda i: (0, 0)),        # b2
            pl.BlockSpec((Hp, 1), lambda i: (0, 0)),        # w3
            pl.BlockSpec((1, 1), lambda i: (0, 0)),         # b3
        ],
        out_specs=pl.BlockSpec((TB, 1), lambda i: (i, 0)),
        compiler_params=pltpu.CompilerParams(
            dimension_semantics=("parallel",),
        ),
        cost_estimate=cost,
    )(x_flat, w1, b1, w2, b2, w3, b3)

    return out[:B] if B8 != B else out


def init_params(key, input_dim, hidden_dim):
    """Deterministic init mimicking PyTorch Linear default (U(-1/sqrt(fan_in), +))."""
    k1, k2, k3, k4, k5, k6 = jax.random.split(key, 6)

    def lin(kw, kb, fan_in, fan_out):
        bound = 1.0 / math.sqrt(fan_in)
        w = jax.random.uniform(kw, (fan_in, fan_out), jnp.float32, -bound, bound)
        b = jax.random.uniform(kb, (1, fan_out), jnp.float32, -bound, bound)
        return w, b

    w1, b1 = lin(k1, k2, input_dim, hidden_dim)
    w2, b2 = lin(k3, k4, hidden_dim, hidden_dim)
    w3, b3 = lin(k5, k6, hidden_dim, 1)
    return {"w1": w1, "b1": b1, "w2": w2, "b2": b2, "w3": w3, "b3": b3}


def _reference(x, params):
    """Pure-JAX f32 reference matching the PyTorch module exactly."""
    B = x.shape[0]
    xn = (x - _MEAN) / _STD
    xf = xn.reshape(B, -1)
    h1 = jnp.maximum(xf @ params["w1"] + params["b1"], 0.0)
    h2 = jnp.maximum(h1 @ params["w2"] + params["b2"], 0.0)
    return jax.nn.sigmoid(h2 @ params["w3"] + params["b3"])


if __name__ == "__main__":
    key = jax.random.PRNGKey(0)
    kx, kp = jax.random.split(key)

    # Small shapes: batch=2, channels=4, spatial=16x16 -> input_dim = 1024
    B, C, H, W = 2, 4, 16, 16
    input_dim = C * H * W
    hidden_dim = 32

    x = jax.random.normal(kx, (B, C, H, W), dtype=jnp.float32)
    params = init_params(kp, input_dim, hidden_dim)
    prepared = prepare_params(params)

    out = membership_inference_attacker(x, prepared)
    out = jax.block_until_ready(out)

    # Sanity checks: shape, range, and agreement with the pure-JAX f32
    # reference (tolerance relaxed for the bf16 layer-1/2 matmuls).
    assert out.shape == (B, 1)
    assert bool(jnp.all(jnp.isfinite(out)))
    assert bool(jnp.all((out >= 0.0) & (out <= 1.0)))
    ref = _reference(x, params)
    assert bool(jnp.allclose(out, ref, rtol=2e-2, atol=2e-2)), (
        f"max abs diff {float(jnp.max(jnp.abs(out - ref)))}"
    )

    print("KERNEL_OK")
</pallas_src>

<mosaic_0001>
module attributes {stable_mosaic.version = 11 : i64} {
  func.func @_mlp_kernel(%arg0: i32, %arg1: memref<8x1024xf32, #tpu.memory_space<vmem>>, %arg2: memref<1024x128xbf16, #tpu.memory_space<vmem>>, %arg3: memref<1x128xf32, #tpu.memory_space<vmem>>, %arg4: memref<128x128xbf16, #tpu.memory_space<vmem>>, %arg5: memref<1x128xf32, #tpu.memory_space<vmem>>, %arg6: memref<128x1xf32, #tpu.memory_space<vmem>>, %arg7: memref<1x1xf32, #tpu.memory_space<vmem>>, %arg8: memref<8x1xf32, #tpu.memory_space<vmem>>) attributes {dimension_semantics = [#tpu.dimension_semantics<parallel>], iteration_bounds = array<i64: 1>, scalar_prefetch = 0 : i64, scratch_operands = 0 : i64, tpu.core_type = #tpu.core_type<tc>, window_params = [{transform_indices = @transform_0, window_bounds = array<i64: 8, 1024>}, {pipeline_mode = #tpu.pipeline_mode<synchronous>, transform_indices = @transform_1, window_bounds = array<i64: 1024, 128>}, {pipeline_mode = #tpu.pipeline_mode<synchronous>, transform_indices = @transform_2, window_bounds = array<i64: 1, 128>}, {pipeline_mode = #tpu.pipeline_mode<synchronous>, transform_indices = @transform_3, window_bounds = array<i64: 128, 128>}, {pipeline_mode = #tpu.pipeline_mode<synchronous>, transform_indices = @transform_4, window_bounds = array<i64: 1, 128>}, {pipeline_mode = #tpu.pipeline_mode<synchronous>, transform_indices = @transform_5, window_bounds = array<i64: 128, 1>}, {pipeline_mode = #tpu.pipeline_mode<synchronous>, transform_indices = @transform_6, window_bounds = array<i64: 1, 1>}, {transform_indices = @transform_7, window_bounds = array<i64: 8, 1>}]} {
    %c0 = arith.constant 0 : index
    %c0_0 = arith.constant 0 : index
    %0 = vector.load %arg1[%c0, %c0_0] : memref<8x1024xf32, #tpu.memory_space<vmem>>, vector<8x1024xf32>
    %1 = arith.truncf %0 : vector<8x1024xf32> to vector<8x1024xbf16>
    %c0_1 = arith.constant 0 : index
    %c0_2 = arith.constant 0 : index
    %2 = vector.load %arg2[%c0_1, %c0_2] : memref<1024x128xbf16, #tpu.memory_space<vmem>>, vector<1024x128xbf16>
    %cst = arith.constant dense<0.000000e+00> : vector<8x128xf32>
    %3 = tpu.matmul %1, %2, %cst {dimension_numbers = #tpu.dot_dimension_numbers<[1], [0], [0], [1], [0, 0, 1, 1], [], []>} : vector<8x1024xbf16>, vector<1024x128xbf16>, vector<8x128xf32> -> vector<8x128xf32>
    %c0_3 = arith.constant 0 : index
    %c0_4 = arith.constant 0 : index
    %4 = vector.load %arg3[%c0_3, %c0_4] : memref<1x128xf32, #tpu.memory_space<vmem>>, vector<1x128xf32>
    %5 = vector.broadcast %4 : vector<1x128xf32> to vector<8x128xf32>
    %6 = arith.addf %3, %5 : vector<8x128xf32>
    %cst_5 = arith.constant 0.000000e+00 : f32
    %7 = vector.broadcast %cst_5 : f32 to vector<8x128xf32>
    %8 = arith.maximumf %6, %7 : vector<8x128xf32>
    %9 = arith.truncf %8 : vector<8x128xf32> to vector<8x128xbf16>
    %c0_6 = arith.constant 0 : index
    %c0_7 = arith.constant 0 : index
    %10 = vector.load %arg4[%c0_6, %c0_7] : memref<128x128xbf16, #tpu.memory_space<vmem>>, vector<128x128xbf16>
    %cst_8 = arith.constant dense<0.000000e+00> : vector<8x128xf32>
    %11 = tpu.matmul %9, %10, %cst_8 {dimension_numbers = #tpu.dot_dimension_numbers<[1], [0], [0], [1], [0, 0, 1, 1], [], []>} : vector<8x128xbf16>, vector<128x128xbf16>, vector<8x128xf32> -> vector<8x128xf32>
    %c0_9 = arith.constant 0 : index
    %c0_10 = arith.constant 0 : index
    %12 = vector.load %arg5[%c0_9, %c0_10] : memref<1x128xf32, #tpu.memory_space<vmem>>, vector<1x128xf32>
    %13 = vector.broadcast %12 : vector<1x128xf32> to vector<8x128xf32>
    %14 = arith.addf %11, %13 : vector<8x128xf32>
    %cst_11 = arith.constant 0.000000e+00 : f32
    %15 = vector.broadcast %cst_11 : f32 to vector<8x128xf32>
    %16 = arith.maximumf %14, %15 : vector<8x128xf32>
    %c0_12 = arith.constant 0 : index
    %c0_13 = arith.constant 0 : index
    %17 = vector.load %arg6[%c0_12, %c0_13] : memref<128x1xf32, #tpu.memory_space<vmem>>, vector<128x1xf32>
    %cst_14 = arith.constant dense<0.000000e+00> : vector<8x1xf32>
    %18 = tpu.matmul %16, %17, %cst_14 {dimension_numbers = #tpu.dot_dimension_numbers<[1], [0], [0], [1], [0, 0, 1, 1], [], []>} : vector<8x128xf32>, vector<128x1xf32>, vector<8x1xf32> -> vector<8x1xf32>
    %c0_15 = arith.constant 0 : index
    %c0_16 = arith.constant 0 : index
    %19 = vector.load %arg7[%c0_15, %c0_16] : memref<1x1xf32, #tpu.memory_space<vmem>>, vector<1x1xf32>
    %20 = vector.broadcast %19 : vector<1x1xf32> to vector<8x1xf32>
    %21 = arith.addf %18, %20 : vector<8x1xf32>
    %22 = arith.negf %21 : vector<8x1xf32>
    %23 = math.exp %22 : vector<8x1xf32>
    %cst_17 = arith.constant 1.000000e+00 : f32
    %24 = vector.broadcast %cst_17 : f32 to vector<8x1xf32>
    %25 = arith.addf %24, %23 : vector<8x1xf32>
    %26 = arith.divf %24, %25 : vector<8x1xf32>
    %c0_18 = arith.constant 0 : index
    %c0_19 = arith.constant 0 : index
    %27 = vector.load %arg8[%c0_18, %c0_19] : memref<8x1xf32, #tpu.memory_space<vmem>>, vector<8x1xf32>
    tpu.vector_store %arg8[%c0_18, %c0_19], %26 {strides = array<i32>} : memref<8x1xf32, #tpu.memory_space<vmem>>, vector<8x1xf32>,
    return
  }
  func.func @transform_0(%arg0: i32) -> (i32, i32) {
    %c0_i32 = arith.constant 0 : i32
    %c0_i32_0 = arith.constant 0 : i32
    return %arg0, %c0_i32 : i32, i32
  }
  func.func @transform_1(%arg0: i32) -> (i32, i32) {
    %c0_i32 = arith.constant 0 : i32
    %c0_i32_0 = arith.constant 0 : i32
    %c0_i32_1 = arith.constant 0 : i32
    return %c0_i32, %c0_i32_0 : i32, i32
  }
  func.func @transform_2(%arg0: i32) -> (i32, i32) {
    %c0_i32 = arith.constant 0 : i32
    %c0_i32_0 = arith.constant 0 : i32
    %c0_i32_1 = arith.constant 0 : i32
    return %c0_i32, %c0_i32_0 : i32, i32
  }
  func.func @transform_3(%arg0: i32) -> (i32, i32) {
    %c0_i32 = arith.constant 0 : i32
    %c0_i32_0 = arith.constant 0 : i32
    %c0_i32_1 = arith.constant 0 : i32
    return %c0_i32, %c0_i32_0 : i32, i32
  }
  func.func @transform_4(%arg0: i32) -> (i32, i32) {
    %c0_i32 = arith.constant 0 : i32
    %c0_i32_0 = arith.constant 0 : i32
    %c0_i32_1 = arith.constant 0 : i32
    return %c0_i32, %c0_i32_0 : i32, i32
  }
  func.func @transform_5(%arg0: i32) -> (i32, i32) {
    %c0_i32 = arith.constant 0 : i32
    %c0_i32_0 = arith.constant 0 : i32
    %c0_i32_1 = arith.constant 0 : i32
    return %c0_i32, %c0_i32_0 : i32, i32
  }
  func.func @transform_6(%arg0: i32) -> (i32, i32) {
    %c0_i32 = arith.constant 0 : i32
    %c0_i32_0 = arith.constant 0 : i32
    %c0_i32_1 = arith.constant 0 : i32
    return %c0_i32, %c0_i32_0 : i32, i32
  }
  func.func @transform_7(%arg0: i32) -> (i32, i32) {
    %c0_i32 = arith.constant 0 : i32
    %c0_i32_0 = arith.constant 0 : i32
    return %arg0, %c0_i32 : i32, i32
  }
}

</mosaic_0001>

<llo_original>
// kernel: tpu_custom_call.1
$region0: #{tpu_custom_call.1}
  #allocation0 [shape = 'u32[]', space=smem, size = 0x4, offset = 0x4, fixed_abs, tag = 'smem constant byte address 0x4 - core index']
  #allocation1 [shape = 'u32[144,128]{1,0:T(1,128)}', space=vmem, size = 0x12000, scoped, tag = 'internal scratch']
  #allocation2 [shape = 'f32[1,1]{1,0:T(1,128)S(1)}', space=vmem, size = 0x200, scoped, tag = 'scoped memory for tpu_custom_call.1']
  %s0 = inlined_call_operand.vmem [shape: f32[8,1024], index: 0, kind: input, shape index: {}]
  %s1 = inlined_call_operand.hbm [shape: bf16[1024,128], index: 1, kind: input, shape index: {}]
  %s2 = inlined_call_operand.vmem [shape: f32[1,128], index: 2, kind: input, shape index: {}]
  %s3 = inlined_call_operand.vmem [shape: bf16[128,128], index: 3, kind: input, shape index: {}]
  %s4 = inlined_call_operand.vmem [shape: f32[1,128], index: 4, kind: input, shape index: {}]
  %s5 = inlined_call_operand.vmem [shape: f32[128,1], index: 5, kind: input, shape index: {}]
  %s6 = inlined_call_operand.<no memory space> [shape: f32[1,1], index: 6, kind: input, shape index: {}]
  %s7 = inlined_call_operand.vmem [shape: f32[8,1], index: 7, kind: output, shape index: {}]
  %s8 = sld [smem:[#allocation0]]
  $region42: #{tpu_custom_call.1} parent=0
    _
  %s10 = ssub.s32 1, %s8
  %s11 = scalar_select 0, %s10, %s8
  %v12 = vstv %s6
  %13 = vst [vmem:[#allocation2] sm:$0x1] %v12
  $region1: #{tpu_custom_call.1} parent=0
    #allocation3 [shape = 'u8[262144]{0}', space=vmem, size = 0x40000, scoped, tag = 'input window, operand 1, single buffered']
    #allocation4 [shape = 's32[1]{0}', space=sflag, size = 0x4, scoped, tag = 'scoped memory for tpu_custom_call.1']
    %14 = vsyncpa [#allocation4], 0
    // Predicated region
    $region2: #{tpu_custom_call.1} parent=1 // pred_check
      _
    $region3: #{tpu_custom_call.1} parent=1 // pred_check_branch
      %16 = sbr.rel (0) target = $region5
    $region4: #{tpu_custom_call.1} parent=1 // pred_region
      _
    $region5: #{tpu_custom_call.1} parent=1 // pred_fallthru
      _
    // Predicated region
    $region6: #{tpu_custom_call.1} parent=1 // pred_check
      _
    $region7: #{tpu_custom_call.1} parent=1 // pred_check_branch
      %18 = sbr.rel (0) target = $region9
    $region8: #{tpu_custom_call.1} parent=1 // pred_region
      %s20 = ssub.s32 8192, 8192
      %21 = vsyncadd [#allocation4], %s20
      %s22 = sshll.u32 [#allocation3], 4
      %s23 = int_to_ptr.vmem [resolvable:$true] %s22
      %28 = dma.hbm_to_vmem [thread:$0]  %s1, 8192, %s23, [#allocation4], 64, 64, 4
    $region9: #{tpu_custom_call.1} parent=1 // pred_fallthru
      _
    // Predicated region
    $region10: #{tpu_custom_call.1} parent=1 // pred_check
      _
    $region11: #{tpu_custom_call.1} parent=1 // pred_check_branch
      %30 = sbr.rel (0) target = $region13
    $region12: #{tpu_custom_call.1} parent=1 // pred_region
      _
    $region13: #{tpu_custom_call.1} parent=1 // pred_fallthru
      _
    // Predicated region
    $region14: #{tpu_custom_call.1} parent=1 // pred_check
      _
    $region15: #{tpu_custom_call.1} parent=1 // pred_check_branch
      %32 = sbr.rel (0) target = $region17
    $region16: #{tpu_custom_call.1} parent=1 // pred_region
      _
    $region17: #{tpu_custom_call.1} parent=1 // pred_fallthru
      _
    // Predicated region
    $region18: #{tpu_custom_call.1} parent=1 // pred_check
      _
    $region19: #{tpu_custom_call.1} parent=1 // pred_check_branch
      %34 = sbr.rel (0) target = $region21
    $region20: #{tpu_custom_call.1} parent=1 // pred_region
      _
    $region21: #{tpu_custom_call.1} parent=1 // pred_fallthru
      _
    // Predicated region
    $region22: #{tpu_custom_call.1} parent=1 // pred_check
      _
    $region23: #{tpu_custom_call.1} parent=1 // pred_check_branch
      %36 = sbr.rel (0) target = $region25
    $region24: #{tpu_custom_call.1} parent=1 // pred_region
      _
    $region25: #{tpu_custom_call.1} parent=1 // pred_fallthru
      _
    // Predicated region
    $region26: #{tpu_custom_call.1} parent=1 // pred_check
      _
    $region27: #{tpu_custom_call.1} parent=1 // pred_check_branch
      %38 = sbr.rel (0) target = $region29
    $region28: #{tpu_custom_call.1} parent=1 // pred_region
      _
    $region29: #{tpu_custom_call.1} parent=1 // pred_fallthru
      _
    // Predicated region
    $region30: #{tpu_custom_call.1} parent=1 // pred_check
      _
    $region31: #{tpu_custom_call.1} parent=1 // pred_check_branch
      %40 = sbr.rel (0) target = $region33
    $region32: #{tpu_custom_call.1} parent=1 // pred_region
      %41 = dma.done [#allocation4], 8192
    $region33: #{tpu_custom_call.1} parent=1 // pred_fallthru
      _
    %v43 = vld [vmem:[%s0] sm:$0xff]
    %v44 = vld [vmem:[%s0 + $0x8] sm:$0xff]
    %v45 = vld [vmem:[%s0 + $0x10] sm:$0xff]
    %v46 = vld [vmem:[%s0 + $0x18] sm:$0xff]
    %v47 = vld [vmem:[%s0 + $0x20] sm:$0xff]
    %v48 = vld [vmem:[%s0 + $0x28] sm:$0xff]
    %v49 = vld [vmem:[%s0 + $0x30] sm:$0xff]
    %v50 = vld [vmem:[%s0 + $0x38] sm:$0xff]
    %v51 = vpack.c.bf16 %v43, %v43
    %v52 = vpack.c.bf16 %v44, %v44
    %v53 = vpack.c.bf16 %v45, %v45
    %v54 = vpack.c.bf16 %v46, %v46
    %v55 = vpack.c.bf16 %v47, %v47
    %v56 = vpack.c.bf16 %v48, %v48
    %v57 = vpack.c.bf16 %v49, %v49
    %v58 = vpack.c.bf16 %v50, %v50
    %v59 = vld [vmem:[#allocation3] sm:$0xf]
    %v60 = vld [vmem:[#allocation3 + $0x4] sm:$0xf]
    %v61 = vld [vmem:[#allocation3 + $0x8] sm:$0xf]
    %v62 = vld [vmem:[#allocation3 + $0xc] sm:$0xf]
    %v63 = vld [vmem:[#allocation3 + $0x10] sm:$0xf]
    %v64 = vld [vmem:[#allocation3 + $0x14] sm:$0xf]
    %v65 = vld [vmem:[#allocation3 + $0x18] sm:$0xf]
    %v66 = vld [vmem:[#allocation3 + $0x1c] sm:$0xf]
    %v67 = vld [vmem:[#allocation3 + $0x20] sm:$0xf]
    %v68 = vld [vmem:[#allocation3 + $0x24] sm:$0xf]
    %v69 = vld [vmem:[#allocation3 + $0x28] sm:$0xf]
    %v70 = vld [vmem:[#allocation3 + $0x2c] sm:$0xf]
    %v71 = vld [vmem:[#allocation3 + $0x30] sm:$0xf]
    %v72 = vld [vmem:[#allocation3 + $0x34] sm:$0xf]
    %v73 = vld [vmem:[#allocation3 + $0x38] sm:$0xf]
    %v74 = vld [vmem:[#allocation3 + $0x3c] sm:$0xf]
    %v75 = vld [vmem:[#allocation3 + $0x40] sm:$0xf]
    %v76 = vld [vmem:[#allocation3 + $0x44] sm:$0xf]
    %v77 = vld [vmem:[#allocation3 + $0x48] sm:$0xf]
    %v78 = vld [vmem:[#allocation3 + $0x4c] sm:$0xf]
    %v79 = vld [vmem:[#allocation3 + $0x50] sm:$0xf]
    %v80 = vld [vmem:[#allocation3 + $0x54] sm:$0xf]
    %v81 = vld [vmem:[#allocation3 + $0x58] sm:$0xf]
    %v82 = vld [vmem:[#allocation3 + $0x5c] sm:$0xf]
    %v83 = vld [vmem:[#allocation3 + $0x60] sm:$0xf]
    %v84 = vld [vmem:[#allocation3 + $0x64] sm:$0xf]
    %v85 = vld [vmem:[#allocation3 + $0x68] sm:$0xf]
    %v86 = vld [vmem:[#allocation3 + $0x6c] sm:$0xf]
    %v87 = vld [vmem:[#allocation3 + $0x70] sm:$0xf]
    %v88 = vld [vmem:[#allocation3 + $0x74] sm:$0xf]
    %v89 = vld [vmem:[#allocation3 + $0x78] sm:$0xf]
    %v90 = vld [vmem:[#allocation3 + $0x7c] sm:$0xf]
    %v91 = vld [vmem:[#allocation3 + $0x80] sm:$0xf]
    %v92 = vld [vmem:[#allocation3 + $0x84] sm:$0xf]
    %v93 = vld [vmem:[#allocation3 + $0x88] sm:$0xf]
    %v94 = vld [vmem:[#allocation3 + $0x8c] sm:$0xf]
    %v95 = vld [vmem:[#allocation3 + $0x90] sm:$0xf]
    %v96 = vld [vmem:[#allocation3 + $0x94] sm:$0xf]
    %v97 = vld [vmem:[#allocation3 + $0x98] sm:$0xf]
    %v98 = vld [vmem:[#allocation3 + $0x9c] sm:$0xf]
    %v99 = vld [vmem:[#allocation3 + $0xa0] sm:$0xf]
    %v100 = vld [vmem:[#allocation3 + $0xa4] sm:$0xf]
    %v101 = vld [vmem:[#allocation3 + $0xa8] sm:$0xf]
    %v102 = vld [vmem:[#allocation3 + $0xac] sm:$0xf]
    %v103 = vld [vmem:[#allocation3 + $0xb0] sm:$0xf]
    %v104 = vld [vmem:[#allocation3 + $0xb4] sm:$0xf]
    %v105 = vld [vmem:[#allocation3 + $0xb8] sm:$0xf]
    %v106 = vld [vmem:[#allocation3 + $0xbc] sm:$0xf]
    %v107 = vld [vmem:[#allocation3 + $0xc0] sm:$0xf]
    %v108 = vld [vmem:[#allocation3 + $0xc4] sm:$0xf]
    %v109 = vld [vmem:[#allocation3 + $0xc8] sm:$0xf]
    %v110 = vld [vmem:[#allocation3 + $0xcc] sm:$0xf]
    %v111 = vld [vmem:[#allocation3 + $0xd0] sm:$0xf]
    %v112 = vld [vmem:[#allocation3 + $0xd4] sm:$0xf]
    %v113 = vld [vmem:[#allocation3 + $0xd8] sm:$0xf]
    %v114 = vld [vmem:[#allocation3 + $0xdc] sm:$0xf]
    %v115 = vld [vmem:[#allocation3 + $0xe0] sm:$0xf]
    %v116 = vld [vmem:[#allocation3 + $0xe4] sm:$0xf]
    %v117 = vld [vmem:[#allocation3 + $0xe8] sm:$0xf]
    %v118 = vld [vmem:[#allocation3 + $0xec] sm:$0xf]
    %v119 = vld [vmem:[#allocation3 + $0xf0] sm:$0xf]
    %v120 = vld [vmem:[#allocation3 + $0xf4] sm:$0xf]
    %v121 = vld [vmem:[#allocation3 + $0xf8] sm:$0xf]
    %v122 = vld [vmem:[#allocation3 + $0xfc] sm:$0xf]
    %v123 = vld [vmem:[#allocation3 + $0x100] sm:$0xf]
    %v124 = vld [vmem:[#allocation3 + $0x104] sm:$0xf]
    %v125 = vld [vmem:[#allocation3 + $0x108] sm:$0xf]
    %v126 = vld [vmem:[#allocation3 + $0x10c] sm:$0xf]
    %v127 = vld [vmem:[#allocation3 + $0x110] sm:$0xf]
    %v128 = vld [vmem:[#allocation3 + $0x114] sm:$0xf]
    %v129 = vld [vmem:[#allocation3 + $0x118] sm:$0xf]
    %v130 = vld [vmem:[#allocation3 + $0x11c] sm:$0xf]
    %v131 = vld [vmem:[#allocation3 + $0x120] sm:$0xf]
    %v132 = vld [vmem:[#allocation3 + $0x124] sm:$0xf]
    %v133 = vld [vmem:[#allocation3 + $0x128] sm:$0xf]
    %v134 = vld [vmem:[#allocation3 + $0x12c] sm:$0xf]
    %v135 = vld [vmem:[#allocation3 + $0x130] sm:$0xf]
    %v136 = vld [vmem:[#allocation3 + $0x134] sm:$0xf]
    %v137 = vld [vmem:[#allocation3 + $0x138] sm:$0xf]
    %v138 = vld [vmem:[#allocation3 + $0x13c] sm:$0xf]
    %v139 = vld [vmem:[#allocation3 + $0x140] sm:$0xf]
    %v140 = vld [vmem:[#allocation3 + $0x144] sm:$0xf]
    %v141 = vld [vmem:[#allocation3 + $0x148] sm:$0xf]
    %v142 = vld [vmem:[#allocation3 + $0x14c] sm:$0xf]
    %v143 = vld [vmem:[#allocation3 + $0x150] sm:$0xf]
    %v144 = vld [vmem:[#allocation3 + $0x154] sm:$0xf]
    %v145 = vld [vmem:[#allocation3 + $0x158] sm:$0xf]
    %v146 = vld [vmem:[#allocation3 + $0x15c] sm:$0xf]
    %v147 = vld [vmem:[#allocation3 + $0x160] sm:$0xf]
    %v148 = vld [vmem:[#allocation3 + $0x164] sm:$0xf]
    %v149 = vld [vmem:[#allocation3 + $0x168] sm:$0xf]
    %v150 = vld [vmem:[#allocation3 + $0x16c] sm:$0xf]
    %v151 = vld [vmem:[#allocation3 + $0x170] sm:$0xf]
    %v152 = vld [vmem:[#allocation3 + $0x174] sm:$0xf]
    %v153 = vld [vmem:[#allocation3 + $0x178] sm:$0xf]
    %v154 = vld [vmem:[#allocation3 + $0x17c] sm:$0xf]
    %v155 = vld [vmem:[#allocation3 + $0x180] sm:$0xf]
    %v156 = vld [vmem:[#allocation3 + $0x184] sm:$0xf]
    %v157 = vld [vmem:[#allocation3 + $0x188] sm:$0xf]
    %v158 = vld [vmem:[#allocation3 + $0x18c] sm:$0xf]
    %v159 = vld [vmem:[#allocation3 + $0x190] sm:$0xf]
    %v160 = vld [vmem:[#allocation3 + $0x194] sm:$0xf]
    %v161 = vld [vmem:[#allocation3 + $0x198] sm:$0xf]
    %v162 = vld [vmem:[#allocation3 + $0x19c] sm:$0xf]
    %v163 = vld [vmem:[#allocation3 + $0x1a0] sm:$0xf]
    %v164 = vld [vmem:[#allocation3 + $0x1a4] sm:$0xf]
    %v165 = vld [vmem:[#allocation3 + $0x1a8] sm:$0xf]
    %v166 = vld [vmem:[#allocation3 + $0x1ac] sm:$0xf]
    %v167 = vld [vmem:[#allocation3 + $0x1b0] sm:$0xf]
    %v168 = vld [vmem:[#allocation3 + $0x1b4] sm:$0xf]
    %v169 = vld [vmem:[#allocation3 + $0x1b8] sm:$0xf]
    %v170 = vld [vmem:[#allocation3 + $0x1bc] sm:$0xf]
    %v171 = vld [vmem:[#allocation3 + $0x1c0] sm:$0xf]
    %v172 = vld [vmem:[#allocation3 + $0x1c4] sm:$0xf]
    %v173 = vld [vmem:[#allocation3 + $0x1c8] sm:$0xf]
    %v174 = vld [vmem:[#allocation3 + $0x1cc] sm:$0xf]
    %v175 = vld [vmem:[#allocation3 + $0x1d0] sm:$0xf]
    %v176 = vld [vmem:[#allocation3 + $0x1d4] sm:$0xf]
    %v177 = vld [vmem:[#allocation3 + $0x1d8] sm:$0xf]
    %v178 = vld [vmem:[#allocation3 + $0x1dc] sm:$0xf]
    %v179 = vld [vmem:[#allocation3 + $0x1e0] sm:$0xf]
    %v180 = vld [vmem:[#allocation3 + $0x1e4] sm:$0xf]
    %v181 = vld [vmem:[#allocation3 + $0x1e8] sm:$0xf]
    %v182 = vld [vmem:[#allocation3 + $0x1ec] sm:$0xf]
    %v183 = vld [vmem:[#allocation3 + $0x1f0] sm:$0xf]
    %v184 = vld [vmem:[#allocation3 + $0x1f4] sm:$0xf]
    %v185 = vld [vmem:[#allocation3 + $0x1f8] sm:$0xf]
    %v186 = vld [vmem:[#allocation3 + $0x1fc] sm:$0xf]
    %v187 = vld [vmem:[%s2] sm:$0x1]
    %v189 = vlaneseq
    %v190 = vshrl.u32 %v189, 7
    %v191 = vsub.s32 0, %v190
    %v192 = vrot.slane %v187, %v191
    %v322 = vunpack.c.l.b16 %v59
    %v323 = vunpack.c.l.b16 %v60
    %v324 = vunpack.c.l.b16 %v61
    %v325 = vunpack.c.l.b16 %v62
    %v326 = vunpack.c.l.b16 %v63
    %v327 = vunpack.c.l.b16 %v64
    %v328 = vunpack.c.l.b16 %v65
    %v329 = vunpack.c.l.b16 %v66
    %v330 = vunpack.c.l.b16 %v67
    %v331 = vunpack.c.l.b16 %v68
    %v332 = vunpack.c.l.b16 %v69
    %v333 = vunpack.c.l.b16 %v70
    %v334 = vunpack.c.l.b16 %v71
    %v335 = vunpack.c.l.b16 %v72
    %v336 = vunpack.c.l.b16 %v73
    %v337 = vunpack.c.l.b16 %v74
    %v338 = vunpack.c.l.b16 %v75
    %v339 = vunpack.c.l.b16 %v76
    %v340 = vunpack.c.l.b16 %v77
    %v341 = vunpack.c.l.b16 %v78
    %v342 = vunpack.c.l.b16 %v79
    %v343 = vunpack.c.l.b16 %v80
    %v344 = vunpack.c.l.b16 %v81
    %v345 = vunpack.c.l.b16 %v82
    %v346 = vunpack.c.l.b16 %v83
    %v347 = vunpack.c.l.b16 %v84
    %v348 = vunpack.c.l.b16 %v85
    %v349 = vunpack.c.l.b16 %v86
    %v350 = vunpack.c.l.b16 %v87
    %v351 = vunpack.c.l.b16 %v88
    %v352 = vunpack.c.l.b16 %v89
    %v353 = vunpack.c.l.b16 %v90
    %v354 = vunpack.c.l.b16 %v91
    %v355 = vunpack.c.l.b16 %v92
    %v356 = vunpack.c.l.b16 %v93
    %v357 = vunpack.c.l.b16 %v94
    %v358 = vunpack.c.l.b16 %v95
    %v359 = vunpack.c.l.b16 %v96
    %v360 = vunpack.c.l.b16 %v97
    %v361 = vunpack.c.l.b16 %v98
    %v362 = vunpack.c.l.b16 %v99
    %v363 = vunpack.c.l.b16 %v100
    %v364 = vunpack.c.l.b16 %v101
    %v365 = vunpack.c.l.b16 %v102
    %v366 = vunpack.c.l.b16 %v103
    %v367 = vunpack.c.l.b16 %v104
    %v368 = vunpack.c.l.b16 %v105
    %v369 = vunpack.c.l.b16 %v106
    %v370 = vunpack.c.l.b16 %v107
    %v371 = vunpack.c.l.b16 %v108
    %v372 = vunpack.c.l.b16 %v109
    %v373 = vunpack.c.l.b16 %v110
    %v374 = vunpack.c.l.b16 %v111
    %v375 = vunpack.c.l.b16 %v112
    %v376 = vunpack.c.l.b16 %v113
    %v377 = vunpack.c.l.b16 %v114
    %v378 = vunpack.c.l.b16 %v115
    %v379 = vunpack.c.l.b16 %v116
    %v380 = vunpack.c.l.b16 %v117
    %v381 = vunpack.c.l.b16 %v118
    %v382 = vunpack.c.l.b16 %v119
    %v383 = vunpack.c.l.b16 %v120
    %v384 = vunpack.c.l.b16 %v121
    %v385 = vunpack.c.l.b16 %v122
    %v386 = vunpack.c.l.b16 %v123
    %v387 = vunpack.c.l.b16 %v124
    %v388 = vunpack.c.l.b16 %v125
    %v389 = vunpack.c.l.b16 %v126
    %v390 = vunpack.c.l.b16 %v127
    %v391 = vunpack.c.l.b16 %v128
    %v392 = vunpack.c.l.b16 %v129
    %v393 = vunpack.c.l.b16 %v130
    %v394 = vunpack.c.l.b16 %v131
    %v395 = vunpack.c.l.b16 %v132
    %v396 = vunpack.c.l.b16 %v133
    %v397 = vunpack.c.l.b16 %v134
    %v398 = vunpack.c.l.b16 %v135
    %v399 = vunpack.c.l.b16 %v136
    %v400 = vunpack.c.l.b16 %v137
    %v401 = vunpack.c.l.b16 %v138
    %v402 = vunpack.c.l.b16 %v139
    %v403 = vunpack.c.l.b16 %v140
    %v404 = vunpack.c.l.b16 %v141
    %v405 = vunpack.c.l.b16 %v142
    %v406 = vunpack.c.l.b16 %v143
    %v407 = vunpack.c.l.b16 %v144
    %v408 = vunpack.c.l.b16 %v145
    %v409 = vunpack.c.l.b16 %v146
    %v410 = vunpack.c.l.b16 %v147
    %v411 = vunpack.c.l.b16 %v148
    %v412 = vunpack.c.l.b16 %v149
    %v413 = vunpack.c.l.b16 %v150
    %v414 = vunpack.c.l.b16 %v151
    %v415 = vunpack.c.l.b16 %v152
    %v416 = vunpack.c.l.b16 %v153
    %v417 = vunpack.c.l.b16 %v154
    %v418 = vunpack.c.l.b16 %v155
    %v419 = vunpack.c.l.b16 %v156
    %v420 = vunpack.c.l.b16 %v157
    %v421 = vunpack.c.l.b16 %v158
    %v422 = vunpack.c.l.b16 %v159
    %v423 = vunpack.c.l.b16 %v160
    %v424 = vunpack.c.l.b16 %v161
    %v425 = vunpack.c.l.b16 %v162
    %v426 = vunpack.c.l.b16 %v163
    %v427 = vunpack.c.l.b16 %v164
    %v428 = vunpack.c.l.b16 %v165
    %v429 = vunpack.c.l.b16 %v166
    %v430 = vunpack.c.l.b16 %v167
    %v431 = vunpack.c.l.b16 %v168
    %v432 = vunpack.c.l.b16 %v169
    %v433 = vunpack.c.l.b16 %v170
    %v434 = vunpack.c.l.b16 %v171
    %v435 = vunpack.c.l.b16 %v172
    %v436 = vunpack.c.l.b16 %v173
    %v437 = vunpack.c.l.b16 %v174
    %v438 = vunpack.c.l.b16 %v175
    %v439 = vunpack.c.l.b16 %v176
    %v440 = vunpack.c.l.b16 %v177
    %v441 = vunpack.c.l.b16 %v178
    %v442 = vunpack.c.l.b16 %v179
    %v443 = vunpack.c.l.b16 %v180
    %v444 = vunpack.c.l.b16 %v181
    %v445 = vunpack.c.l.b16 %v182
    %v446 = vunpack.c.l.b16 %v183
    %v447 = vunpack.c.l.b16 %v184
    %v448 = vunpack.c.l.b16 %v185
    %v449 = vunpack.c.l.b16 %v186
    %v450 = vpack.c.b16 %v323, %v322
    %v451 = vpack.c.b16 %v325, %v324
    %v452 = vpack.c.b16 %v327, %v326
    %v453 = vpack.c.b16 %v329, %v328
    %v454 = vpack.c.b16 %v331, %v330
    %v455 = vpack.c.b16 %v333, %v332
    %v456 = vpack.c.b16 %v335, %v334
    %v457 = vpack.c.b16 %v337, %v336
    %v458 = vpack.c.b16 %v339, %v338
    %v459 = vpack.c.b16 %v341, %v340
    %v460 = vpack.c.b16 %v343, %v342
    %v461 = vpack.c.b16 %v345, %v344
    %v462 = vpack.c.b16 %v347, %v346
    %v463 = vpack.c.b16 %v349, %v348
    %v464 = vpack.c.b16 %v351, %v350
    %v465 = vpack.c.b16 %v353, %v352
    %v466 = vpack.c.b16 %v355, %v354
    %v467 = vpack.c.b16 %v357, %v356
    %v468 = vpack.c.b16 %v359, %v358
    %v469 = vpack.c.b16 %v361, %v360
    %v470 = vpack.c.b16 %v363, %v362
    %v471 = vpack.c.b16 %v365, %v364
    %v472 = vpack.c.b16 %v367, %v366
    %v473 = vpack.c.b16 %v369, %v368
    %v474 = vpack.c.b16 %v371, %v370
    %v475 = vpack.c.b16 %v373, %v372
    %v476 = vpack.c.b16 %v375, %v374
    %v477 = vpack.c.b16 %v377, %v376
    %v478 = vpack.c.b16 %v379, %v378
    %v479 = vpack.c.b16 %v381, %v380
    %v480 = vpack.c.b16 %v383, %v382
    %v481 = vpack.c.b16 %v385, %v384
    %v482 = vpack.c.b16 %v387, %v386
    %v483 = vpack.c.b16 %v389, %v388
    %v484 = vpack.c.b16 %v391, %v390
    %v485 = vpack.c.b16 %v393, %v392
    %v486 = vpack.c.b16 %v395, %v394
    %v487 = vpack.c.b16 %v397, %v396
    %v488 = vpack.c.b16 %v399, %v398
    %v489 = vpack.c.b16 %v401, %v400
    %v490 = vpack.c.b16 %v403, %v402
    %v491 = vpack.c.b16 %v405, %v404
    %v492 = vpack.c.b16 %v407, %v406
    %v493 = vpack.c.b16 %v409, %v408
    %v494 = vpack.c.b16 %v411, %v410
    %v495 = vpack.c.b16 %v413, %v412
    %v496 = vpack.c.b16 %v415, %v414
    %v497 = vpack.c.b16 %v417, %v416
    %v498 = vpack.c.b16 %v419, %v418
    %v499 = vpack.c.b16 %v421, %v420
    %v500 = vpack.c.b16 %v423, %v422
    %v501 = vpack.c.b16 %v425, %v424
    %v502 = vpack.c.b16 %v427, %v426
    %v503 = vpack.c.b16 %v429, %v428
    %v504 = vpack.c.b16 %v431, %v430
    %v505 = vpack.c.b16 %v433, %v432
    %v506 = vpack.c.b16 %v435, %v434
    %v507 = vpack.c.b16 %v437, %v436
    %v508 = vpack.c.b16 %v439, %v438
    %v509 = vpack.c.b16 %v441, %v440
    %v510 = vpack.c.b16 %v443, %v442
    %v511 = vpack.c.b16 %v445, %v444
    %v512 = vpack.c.b16 %v447, %v446
    %v513 = vpack.c.b16 %v449, %v448
    %578 = vmatprep.subr.bf16.mxu0 0
    %579 = vmatpush1.bf16.msra.mxu0 %v457
    %580 = vmatprep.subr.bf16.mxu0 0
    %581 = vmatpush1.bf16.msra.mxu0 %v456
    %582 = vmatprep.subr.bf16.mxu0 0
    %583 = vmatpush1.bf16.msra.mxu0 %v455
    %584 = vmatprep.subr.bf16.mxu0 0
    %585 = vmatpush1.bf16.msra.mxu0 %v454
    %586 = vmatprep.subr.bf16.mxu0 0
    %587 = vmatpush1.bf16.msra.mxu0 %v453
    %588 = vmatprep.subr.bf16.mxu0 0
    %589 = vmatpush1.bf16.msra.mxu0 %v452
    %590 = vmatprep.subr.bf16.mxu0 0
    %591 = vmatpush1.bf16.msra.mxu0 %v451
    %592 = vmatprep.subr.bf16.mxu0 0
    %593 = vmatpush1.bf16.msra.mxu0 %v450
    %594 = vmatprep.subr.bf16.mxu0 0
    %595 = vmatpush2.bf16.msra.mxu0 %v465
    %596 = vmatprep.subr.bf16.mxu0 0
    %597 = vmatpush2.bf16.msra.mxu0 %v464
    %598 = vmatprep.subr.bf16.mxu0 0
    %599 = vmatpush2.bf16.msra.mxu0 %v463
    %600 = vmatprep.subr.bf16.mxu0 0
    %601 = vmatpush2.bf16.msra.mxu0 %v462
    %602 = vmatprep.subr.bf16.mxu0 0
    %603 = vmatpush2.bf16.msra.mxu0 %v461
    %604 = vmatprep.subr.bf16.mxu0 0
    %605 = vmatpush2.bf16.msra.mxu0 %v460
    %606 = vmatprep.subr.bf16.mxu0 0
    %607 = vmatpush2.bf16.msra.mxu0 %v459
    %608 = vmatprep.subr.bf16.mxu0 0
    %609 = vmatpush2.bf16.msra.mxu0 %v458
    %610 = vmatprep.mubr.bf16.mxu0 %v52
    %611 = vmatmul.mubr.bf16.gmra.mxu0 %v51
    %v612 = vpop.f32.mrf.mxu0
    %v613 = vadd.f32 %v192, %v612
    %v614 = vpop.f32.mrf.mxu0
    %v615 = vpop.f32.mrf.mxu0
    %v616 = vpop.f32.mrf.mxu0
    %617 = vdwg.mxu0
    %618 = vmatprep.subr.bf16.mxu0 0
    %619 = vmatpush1.bf16.msra.mxu0 %v473
    %620 = vmatprep.subr.bf16.mxu0 0
    %621 = vmatpush1.bf16.msra.mxu0 %v472
    %622 = vmatprep.subr.bf16.mxu0 0
    %623 = vmatpush1.bf16.msra.mxu0 %v471
    %624 = vmatprep.subr.bf16.mxu0 0
    %625 = vmatpush1.bf16.msra.mxu0 %v470
    %626 = vmatprep.subr.bf16.mxu0 0
    %627 = vmatpush1.bf16.msra.mxu0 %v469
    %628 = vmatprep.subr.bf16.mxu0 0
    %629 = vmatpush1.bf16.msra.mxu0 %v468
    %630 = vmatprep.subr.bf16.mxu0 0
    %631 = vmatpush1.bf16.msra.mxu0 %v467
    %632 = vmatprep.subr.bf16.mxu0 0
    %633 = vmatpush1.bf16.msra.mxu0 %v466
    %634 = vmatprep.subr.bf16.mxu0 0
    %635 = vmatpush2.bf16.msra.mxu0 %v481
    %636 = vmatprep.subr.bf16.mxu0 0
    %637 = vmatpush2.bf16.msra.mxu0 %v480
    %638 = vmatprep.subr.bf16.mxu0 0
    %639 = vmatpush2.bf16.msra.mxu0 %v479
    %640 = vmatprep.subr.bf16.mxu0 0
    %641 = vmatpush2.bf16.msra.mxu0 %v478
    %642 = vmatprep.subr.bf16.mxu0 0
    %643 = vmatpush2.bf16.msra.mxu0 %v477
    %644 = vmatprep.subr.bf16.mxu0 0
    %645 = vmatpush2.bf16.msra.mxu0 %v476
    %646 = vmatprep.subr.bf16.mxu0 0
    %647 = vmatpush2.bf16.msra.mxu0 %v475
    %648 = vmatprep.subr.bf16.mxu0 0
    %649 = vmatpush2.bf16.msra.mxu0 %v474
    %650 = vmatprep.mubr.bf16.mxu0 %v54
    %651 = vmatmul.mubr.bf16.gmra.mxu0 %v53
    %v652 = vpop.f32.mrf.mxu0
    %v653 = vadd.f32 %v613, %v652
    %v654 = vpop.f32.mrf.mxu0
    %v655 = vpop.f32.mrf.mxu0
    %v656 = vpop.f32.mrf.mxu0
    %657 = vdwg.mxu0
    %658 = vmatprep.subr.bf16.mxu0 0
    %659 = vmatpush1.bf16.msra.mxu0 %v489
    %660 = vmatprep.subr.bf16.mxu0 0
    %661 = vmatpush1.bf16.msra.mxu0 %v488
    %662 = vmatprep.subr.bf16.mxu0 0
    %663 = vmatpush1.bf16.msra.mxu0 %v487
    %664 = vmatprep.subr.bf16.mxu0 0
    %665 = vmatpush1.bf16.msra.mxu0 %v486
    %666 = vmatprep.subr.bf16.mxu0 0
    %667 = vmatpush1.bf16.msra.mxu0 %v485
    %668 = vmatprep.subr.bf16.mxu0 0
    %669 = vmatpush1.bf16.msra.mxu0 %v484
    %670 = vmatprep.subr.bf16.mxu0 0
    %671 = vmatpush1.bf16.msra.mxu0 %v483
    %672 = vmatprep.subr.bf16.mxu0 0
    %673 = vmatpush1.bf16.msra.mxu0 %v482
    %674 = vmatprep.subr.bf16.mxu0 0
    %675 = vmatpush2.bf16.msra.mxu0 %v497
    %676 = vmatprep.subr.bf16.mxu0 0
    %677 = vmatpush2.bf16.msra.mxu0 %v496
    %678 = vmatprep.subr.bf16.mxu0 0
    %679 = vmatpush2.bf16.msra.mxu0 %v495
    %680 = vmatprep.subr.bf16.mxu0 0
    %681 = vmatpush2.bf16.msra.mxu0 %v494
    %682 = vmatprep.subr.bf16.mxu0 0
    %683 = vmatpush2.bf16.msra.mxu0 %v493
    %684 = vmatprep.subr.bf16.mxu0 0
    %685 = vmatpush2.bf16.msra.mxu0 %v492
    %686 = vmatprep.subr.bf16.mxu0 0
    %687 = vmatpush2.bf16.msra.mxu0 %v491
    %688 = vmatprep.subr.bf16.mxu0 0
    %689 = vmatpush2.bf16.msra.mxu0 %v490
    %690 = vmatprep.mubr.bf16.mxu0 %v56
    %691 = vmatmul.mubr.bf16.gmra.mxu0 %v55
    %v692 = vpop.f32.mrf.mxu0
    %v693 = vadd.f32 %v653, %v692
    %v694 = vpop.f32.mrf.mxu0
    %v695 = vpop.f32.mrf.mxu0
    %v696 = vpop.f32.mrf.mxu0
    %697 = vdwg.mxu0
    %698 = vmatprep.subr.bf16.mxu0 0
    %699 = vmatpush1.bf16.msra.mxu0 %v505
    %700 = vmatprep.subr.bf16.mxu0 0
    %701 = vmatpush1.bf16.msra.mxu0 %v504
    %702 = vmatprep.subr.bf16.mxu0 0
    %703 = vmatpush1.bf16.msra.mxu0 %v503
    %704 = vmatprep.subr.bf16.mxu0 0
    %705 = vmatpush1.bf16.msra.mxu0 %v502
    %706 = vmatprep.subr.bf16.mxu0 0
    %707 = vmatpush1.bf16.msra.mxu0 %v501
    %708 = vmatprep.subr.bf16.mxu0 0
    %709 = vmatpush1.bf16.msra.mxu0 %v500
    %710 = vmatprep.subr.bf16.mxu0 0
    %711 = vmatpush1.bf16.msra.mxu0 %v499
    %712 = vmatprep.subr.bf16.mxu0 0
    %713 = vmatpush1.bf16.msra.mxu0 %v498
    %714 = vmatprep.subr.bf16.mxu0 0
    %715 = vmatpush2.bf16.msra.mxu0 %v513
    %716 = vmatprep.subr.bf16.mxu0 0
    %717 = vmatpush2.bf16.msra.mxu0 %v512
    %718 = vmatprep.subr.bf16.mxu0 0
    %719 = vmatpush2.bf16.msra.mxu0 %v511
    %720 = vmatprep.subr.bf16.mxu0 0
    %721 = vmatpush2.bf16.msra.mxu0 %v510
    %722 = vmatprep.subr.bf16.mxu0 0
    %723 = vmatpush2.bf16.msra.mxu0 %v509
    %724 = vmatprep.subr.bf16.mxu0 0
    %725 = vmatpush2.bf16.msra.mxu0 %v508
    %726 = vmatprep.subr.bf16.mxu0 0
    %727 = vmatpush2.bf16.msra.mxu0 %v507
    %728 = vmatprep.subr.bf16.mxu0 0
    %729 = vmatpush2.bf16.msra.mxu0 %v506
    %730 = vmatprep.mubr.bf16.mxu0 %v58
    %731 = vmatmul.mubr.bf16.gmra.mxu0 %v57
    %v732 = vpop.f32.mrf.mxu0
    %v733 = vadd.f32 %v693, %v732
    %v734 = vpop.f32.mrf.mxu0
    %v735 = vpop.f32.mrf.mxu0
    %v736 = vpop.f32.mrf.mxu0
    %737 = vdwg.mxu0
    %v738 = vmax.f32 %v733, 0.0
    %v739 = vpack.c.bf16 %v738, %v738
    %v740 = vld [vmem:[%s3] sm:$0xf]
    %v741 = vld [vmem:[%s3 + $0x4] sm:$0xf]
    %v742 = vld [vmem:[%s3 + $0x8] sm:$0xf]
    %v743 = vld [vmem:[%s3 + $0xc] sm:$0xf]
    %v744 = vld [vmem:[%s3 + $0x10] sm:$0xf]
    %v745 = vld [vmem:[%s3 + $0x14] sm:$0xf]
    %v746 = vld [vmem:[%s3 + $0x18] sm:$0xf]
    %v747 = vld [vmem:[%s3 + $0x1c] sm:$0xf]
    %v748 = vld [vmem:[%s3 + $0x20] sm:$0xf]
    %v749 = vld [vmem:[%s3 + $0x24] sm:$0xf]
    %v750 = vld [vmem:[%s3 + $0x28] sm:$0xf]
    %v751 = vld [vmem:[%s3 + $0x2c] sm:$0xf]
    %v752 = vld [vmem:[%s3 + $0x30] sm:$0xf]
    %v753 = vld [vmem:[%s3 + $0x34] sm:$0xf]
    %v754 = vld [vmem:[%s3 + $0x38] sm:$0xf]
    %v755 = vld [vmem:[%s3 + $0x3c] sm:$0xf]
    %v756 = vld [vmem:[%s4] sm:$0x1]
    %v758 = vlaneseq
    %v759 = vshrl.u32 %v758, 7
    %v760 = vsub.s32 0, %v759
    %v761 = vrot.slane %v756, %v760
    %v779 = vunpack.c.l.b16 %v740
    %v780 = vunpack.c.l.b16 %v741
    %v781 = vunpack.c.l.b16 %v742
    %v782 = vunpack.c.l.b16 %v743
    %v783 = vunpack.c.l.b16 %v744
    %v784 = vunpack.c.l.b16 %v745
    %v785 = vunpack.c.l.b16 %v746
    %v786 = vunpack.c.l.b16 %v747
    %v787 = vunpack.c.l.b16 %v748
    %v788 = vunpack.c.l.b16 %v749
    %v789 = vunpack.c.l.b16 %v750
    %v790 = vunpack.c.l.b16 %v751
    %v791 = vunpack.c.l.b16 %v752
    %v792 = vunpack.c.l.b16 %v753
    %v793 = vunpack.c.l.b16 %v754
    %v794 = vunpack.c.l.b16 %v755
    %v795 = vpack.c.b16 %v780, %v779
    %v796 = vpack.c.b16 %v782, %v781
    %v797 = vpack.c.b16 %v784, %v783
    %v798 = vpack.c.b16 %v786, %v785
    %v799 = vpack.c.b16 %v788, %v787
    %v800 = vpack.c.b16 %v790, %v789
    %v801 = vpack.c.b16 %v792, %v791
    %v802 = vpack.c.b16 %v794, %v793
    %811 = vmatprep.subr.bf16.mxu0 0
    %812 = vmatpush1.bf16.msra.mxu0 %v802
    %813 = vmatprep.subr.bf16.mxu0 0
    %814 = vmatpush1.bf16.msra.mxu0 %v801
    %815 = vmatprep.subr.bf16.mxu0 0
    %816 = vmatpush1.bf16.msra.mxu0 %v800
    %817 = vmatprep.subr.bf16.mxu0 0
    %818 = vmatpush1.bf16.msra.mxu0 %v799
    %819 = vmatprep.subr.bf16.mxu0 0
    %820 = vmatpush1.bf16.msra.mxu0 %v798
    %821 = vmatprep.subr.bf16.mxu0 0
    %822 = vmatpush1.bf16.msra.mxu0 %v797
    %823 = vmatprep.subr.bf16.mxu0 0
    %824 = vmatpush1.bf16.msra.mxu0 %v796
    %825 = vmatprep.subr.bf16.mxu0 0
    %826 = vmatpush1.bf16.msra.mxu0 %v795
    %827 = vmatprep.subr.bf16.mxu0 0
    %828 = vmatpush2.bf16.msra.mxu0 0
    %829 = vmatprep.subr.bf16.mxu0 0
    %830 = vmatpush2.bf16.msra.mxu0 0
    %831 = vmatprep.subr.bf16.mxu0 0
    %832 = vmatpush2.bf16.msra.mxu0 0
    %833 = vmatprep.subr.bf16.mxu0 0
    %834 = vmatpush2.bf16.msra.mxu0 0
    %835 = vmatprep.subr.bf16.mxu0 0
    %836 = vmatpush2.bf16.msra.mxu0 0
    %837 = vmatprep.subr.bf16.mxu0 0
    %838 = vmatpush2.bf16.msra.mxu0 0
    %839 = vmatprep.subr.bf16.mxu0 0
    %840 = vmatpush2.bf16.msra.mxu0 0
    %841 = vmatprep.subr.bf16.mxu0 0
    %842 = vmatpush2.bf16.msra.mxu0 0
    %843 = vmatprep.mubr.bf16.mxu0 0
    %844 = vmatmul.mubr.bf16.gmra.mxu0 %v739
    %v845 = vpop.f32.mrf.mxu0
    %v846 = vadd.f32 %v761, %v845
    %v847 = vpop.f32.mrf.mxu0
    %v848 = vpop.f32.mrf.mxu0
    %v849 = vpop.f32.mrf.mxu0
    %850 = vdwg.mxu0
    %v851 = vmax.f32 %v846, 0.0
    %v852 = vld [vmem:[%s5] sm:$0xff]
    %v853 = vld [vmem:[%s5 + $0x8] sm:$0xff]
    %v854 = vld [vmem:[%s5 + $0x10] sm:$0xff]
    %v855 = vld [vmem:[%s5 + $0x18] sm:$0xff]
    %v856 = vld [vmem:[%s5 + $0x20] sm:$0xff]
    %v857 = vld [vmem:[%s5 + $0x28] sm:$0xff]
    %v858 = vld [vmem:[%s5 + $0x30] sm:$0xff]
    %v859 = vld [vmem:[%s5 + $0x38] sm:$0xff]
    %v860 = vld [vmem:[%s5 + $0x40] sm:$0xff]
    %v861 = vld [vmem:[%s5 + $0x48] sm:$0xff]
    %v862 = vld [vmem:[%s5 + $0x50] sm:$0xff]
    %v863 = vld [vmem:[%s5 + $0x58] sm:$0xff]
    %v864 = vld [vmem:[%s5 + $0x60] sm:$0xff]
    %v865 = vld [vmem:[%s5 + $0x68] sm:$0xff]
    %v866 = vld [vmem:[%s5 + $0x70] sm:$0xff]
    %v867 = vld [vmem:[%s5 + $0x78] sm:$0xff]
    %v868 = vld [vmem:[#allocation2] sm:$0x1]
    %v870 = vlaneseq
    %v871 = vshrl.u32 %v870, 7
    %v872 = vsub.s32 0, %v871
    %v873 = vrot.slane %v868, %v872
    %875 = vmatprep.subr.mxu0 0.0
    %876 = vmatpush1.msra.mxu0 %v867
    %877 = vmatprep.subr.mxu0 0.0
    %878 = vmatpush1.msra.mxu0 %v866
    %879 = vmatprep.subr.mxu0 0.0
    %880 = vmatpush1.msra.mxu0 %v865
    %881 = vmatprep.subr.mxu0 0.0
    %882 = vmatpush1.msra.mxu0 %v864
    %883 = vmatprep.subr.mxu0 0.0
    %884 = vmatpush1.msra.mxu0 %v863
    %885 = vmatprep.subr.mxu0 0.0
    %886 = vmatpush1.msra.mxu0 %v862
    %887 = vmatprep.subr.mxu0 0.0
    %888 = vmatpush1.msra.mxu0 %v861
    %889 = vmatprep.subr.mxu0 0.0
    %890 = vmatpush1.msra.mxu0 %v860
    %891 = vmatprep.subr.mxu0 0.0
    %892 = vmatpush1.msra.mxu0 %v859
    %893 = vmatprep.subr.mxu0 0.0
    %894 = vmatpush1.msra.mxu0 %v858
    %895 = vmatprep.subr.mxu0 0.0
    %896 = vmatpush1.msra.mxu0 %v857
    %897 = vmatprep.subr.mxu0 0.0
    %898 = vmatpush1.msra.mxu0 %v856
    %899 = vmatprep.subr.mxu0 0.0
    %900 = vmatpush1.msra.mxu0 %v855
    %901 = vmatprep.subr.mxu0 0.0
    %902 = vmatpush1.msra.mxu0 %v854
    %903 = vmatprep.subr.mxu0 0.0
    %904 = vmatpush1.msra.mxu0 %v853
    %905 = vmatprep.subr.mxu0 0.0
    %906 = vmatpush1.msra.mxu0 %v852
    %907 = vmatprep.subr.mxu0 0.0
    %908 = vmatpush2.msra.mxu0 0.0
    %909 = vmatprep.subr.mxu0 0.0
    %910 = vmatpush2.msra.mxu0 0.0
    %911 = vmatprep.subr.mxu0 0.0
    %912 = vmatpush2.msra.mxu0 0.0
    %913 = vmatprep.subr.mxu0 0.0
    %914 = vmatpush2.msra.mxu0 0.0
    %915 = vmatprep.subr.mxu0 0.0
    %916 = vmatpush2.msra.mxu0 0.0
    %917 = vmatprep.subr.mxu0 0.0
    %918 = vmatpush2.msra.mxu0 0.0
    %919 = vmatprep.subr.mxu0 0.0
    %920 = vmatpush2.msra.mxu0 0.0
    %921 = vmatprep.subr.mxu0 0.0
    %922 = vmatpush2.msra.mxu0 0.0
    %923 = vmatprep.subr.mxu0 0.0
    %924 = vmatpush2.msra.mxu0 0.0
    %925 = vmatprep.subr.mxu0 0.0
    %926 = vmatpush2.msra.mxu0 0.0
    %927 = vmatprep.subr.mxu0 0.0
    %928 = vmatpush2.msra.mxu0 0.0
    %929 = vmatprep.subr.mxu0 0.0
    %930 = vmatpush2.msra.mxu0 0.0
    %931 = vmatprep.subr.mxu0 0.0
    %932 = vmatpush2.msra.mxu0 0.0
    %933 = vmatprep.subr.mxu0 0.0
    %934 = vmatpush2.msra.mxu0 0.0
    %935 = vmatprep.subr.mxu0 0.0
    %936 = vmatpush2.msra.mxu0 0.0
    %937 = vmatprep.subr.mxu0 0.0
    %938 = vmatpush2.msra.mxu0 0.0
    %939 = vmatprep.mubr.f32.mxu0 0.0
    %940 = vmatmul.mubr.f32.gmra.mxu0 %v851
    %v941 = vpop.f32.mrf.mxu0
    %v942 = vadd.f32 %v873, %v941
    %v943 = vpop.f32.mrf.mxu0
    %944 = vdwg.mxu0
    %v945 = vxor.u32 %v942, 2147483648
    %v946 = vmul.f32 %v945, 1.442695
    %v947 = vpow.pop %v946
    %v948 = vadd.f32 %v947, 1.0
    %v949 = vrcp.pop %v948
    %v950 = vmul.f32 1.0, %v949
    %vm951 = vcmask 7168
    %952 = vst.msk [vmem:[%s7] sm:$0xff] %vm951, %v950
    // Predicated region
    $region34: #{tpu_custom_call.1} parent=1 // pred_check
      _
    $region35: #{tpu_custom_call.1} parent=1 // pred_check_branch
      %954 = sbr.rel (0) target = $region37
    $region36: #{tpu_custom_call.1} parent=1 // pred_region
      _
    $region37: #{tpu_custom_call.1} parent=1 // pred_fallthru
      _
    // Predicated region
    $region38: #{tpu_custom_call.1} parent=1 // pred_check
      _
    $region39: #{tpu_custom_call.1} parent=1 // pred_check_branch
      %956 = sbr.rel (0) target = $region41
    $region40: #{tpu_custom_call.1} parent=1 // pred_region
      _
    $region41: #{tpu_custom_call.1} parent=1 // pred_fallthru
      _
    %957 = vsyncpa [#allocation4], 1

</llo_original>
